<compile_context>
chip_gen: v7x
topology: tpu7x:2x2x1
jax: 0.10.0
libtpu: 0.0.40
codegen_flags: <defaults>
</compile_context>

<pallas_src>
import math

import jax
import jax.numpy as jnp
from jax.experimental import pallas as pl
from jax.experimental.pallas import tpu as pltpu


def _featurewise_affine_kernel(x_ref, scale_ref, shift_ref, o_ref):
    # x_ref / o_ref: (TL, D) tiles; scale_ref / shift_ref: (1, D), broadcast
    # over the TL (sublane) axis by jnp semantics.  Mixed dtypes promote
    # in-register (free VPU work); keep the body minimal.
    o_ref[...] = (x_ref[...] * scale_ref[...] + shift_ref[...]).astype(o_ref.dtype)


def _vmem_limit_bytes():
    """Generation-aware scoped-VMEM budget for this kernel."""
    cap = 128 * 1024 * 1024
    try:
        info = pltpu.get_tpu_info()
        cap = int(getattr(info, "vmem_capacity_bytes", cap) or cap)
    except Exception:
        pass
    if cap <= 64 * 1024 * 1024:
        # v7x-class: 64 MiB per TensorCore; cap well below it for headroom.
        return 40 * 1024 * 1024
    # v5e / v6e: 128 MiB physical (default scoped limit is only 16-32 MiB).
    return 64 * 1024 * 1024


def _sublane(*itemsizes):
    # 8 rows for 4-byte dtypes, 16 for 2-byte, 32 for 1-byte; the narrower
    # (packed) dtype imposes the stricter requirement.
    return max(8, 32 // max(1, min(itemsizes)))


def _choose_seq_tile(L, D, x_itemsize, out_itemsize, vmem_limit):
    """Biggest sublane-aligned sequence tile that fits the VMEM budget and
    (near-)evenly divides L."""
    sub = _sublane(x_itemsize, out_itemsize)
    per_row = max(1, D) * (x_itemsize + out_itemsize)
    # Live VMEM ~= 2 * (x tile + out tile) with default double buffering;
    # keep ~4 MiB headroom for scale/shift + compiler scratch.
    tiles_budget = max(vmem_limit - 4 * 1024 * 1024, vmem_limit // 2)
    tl_max = max(sub, (tiles_budget // (2 * per_row)) // sub * sub)
    # Overhead-amortizing target size for the x tile itself.
    target_bytes = (8 if vmem_limit >= 48 * 1024 * 1024 else 6) * 1024 * 1024
    tl_target = max(sub, target_bytes // max(1, D * x_itemsize))
    tl_target = min(tl_target, tl_max)
    if tl_target >= L:
        return L  # full extent is always a legal block shape
    # Near-even division of L so the last tile is not ragged/masked.
    n_tiles = pl.cdiv(L, tl_target)
    tl = pl.cdiv(L, n_tiles)
    tl = ((tl + sub - 1) // sub) * sub
    tl = max(sub, min(tl, tl_max))
    return min(tl, L)


def _featurewise_affine_pallas(x, scale, shift, out_dtype, *,
                               seq_tile=None, donate_x=False):
    """Pallas path. x: (B, L, D) in its native dtype; scale/shift: (B, 1, D)
    already in out_dtype."""
    B, L, D = x.shape
    assert scale.shape == (B, 1, D) and shift.shape == (B, 1, D)

    x_item = jnp.dtype(x.dtype).itemsize
    o_item = jnp.dtype(out_dtype).itemsize
    vmem_limit = _vmem_limit_bytes()
    sub = _sublane(x_item, o_item)

    if seq_tile is not None:
        # Re-align user tiles to the sublane granularity (or full extent).
        tl = L if seq_tile >= L else max(sub, (seq_tile // sub) * sub)
    else:
        tl = _choose_seq_tile(L, D, x_item, o_item, vmem_limit)
    tl = max(1, min(tl, L))

    n_l = pl.cdiv(L, tl)

    # Put the larger parallel extent outermost so v7x's two TensorCores get an
    # even split even when B == 1 (no effect on single-TC v5e/v6e).  The tiny
    # per-step scale/shift re-DMA this can cause is noise (a few KiB/step).
    if n_l >= B:
        grid = (n_l, B)
        x_map = lambda l, b: (b, l, 0)
        s_map = lambda l, b: (b, 0, 0)
    else:
        grid = (B, n_l)
        x_map = lambda b, l: (b, l, 0)
        s_map = lambda b, l: (b, 0, 0)

    grid_spec = pltpu.PrefetchScalarGridSpec(
        num_scalar_prefetch=0,
        grid=grid,
        in_specs=[
            # x: one (TL, D) tile per grid point.
            # TODO(synk): sweep pipeline_mode=pl.Buffered(3) here if v7x
            # profiling shows exposed DMA at the chosen tile size.
            pl.BlockSpec((pl.Squeezed(), tl, D), x_map),
            # scale / shift: tiny per-batch blocks.
            pl.BlockSpec((pl.Squeezed(), 1, D), s_map),
            pl.BlockSpec((pl.Squeezed(), 1, D), s_map),
        ],
        out_specs=pl.BlockSpec((pl.Squeezed(), tl, D), x_map),
    )

    extra_kwargs = {}
    if donate_x and jnp.dtype(x.dtype) == jnp.dtype(out_dtype):
        # Optional destructive update: out aliases x (only legal when the
        # dtypes match; note it aliases the possibly-reshaped temporary).
        extra_kwargs["input_output_aliases"] = {0: 0}

    cost = pl.CostEstimate(
        flops=2 * B * L * D,
        transcendentals=0,
        bytes_accessed=B * L * D * (x_item + o_item) + 2 * B * D * o_item,
    )

    return pl.pallas_call(
        _featurewise_affine_kernel,
        out_shape=jax.ShapeDtypeStruct((B, L, D), out_dtype),
        grid_spec=grid_spec,
        compiler_params=pltpu.CompilerParams(
            # No accumulation anywhere -> both axes independent / parallel.
            dimension_semantics=("parallel", "parallel"),
            vmem_limit_bytes=vmem_limit,
        ),
        cost_estimate=cost,
        **extra_kwargs,
    )(x, scale, shift)


def featurewise_affine(x, scale, shift, *, seq_tile=None,
                       min_pallas_bytes=4 * 1024 * 1024, donate_x=False):
    """out = x * scale + shift (PyTorch broadcasting semantics).

    The Pallas fast path handles the canonical (B, L, D) x with scale/shift
    broadcastable to (B, 1, D).  Anything else, or problems smaller than
    `min_pallas_bytes`, falls back to XLA's fused elementwise op (which wins
    there and preserves producer/consumer fusion).
    """
    out_dtype = jnp.result_type(x.dtype, scale.dtype, shift.dtype)

    def _fallback():
        return (x * scale + shift).astype(out_dtype)

    if x.ndim != 3 or x.size == 0:
        # TODO(synk): general-rank broadcasting not expressed as a Pallas grid
        # here; XLA's fused elementwise op handles it.
        return _fallback()

    B, L, D = x.shape
    try:
        scale_b = jnp.broadcast_to(scale, (B, 1, D)).astype(out_dtype)
        shift_b = jnp.broadcast_to(shift, (B, 1, D)).astype(out_dtype)
    except ValueError:
        # scale/shift vary along the sequence axis (or are incompatible with
        # the canonical FiLM layout) -> plain broadcasting fallback.
        return _fallback()

    x_item = jnp.dtype(x.dtype).itemsize
    o_item = jnp.dtype(out_dtype).itemsize
    if x.size * max(x_item, o_item) < min_pallas_bytes:
        # Launch + per-step overhead (and lost fusion) dominate tiny problems.
        return _fallback()

    # x stays in its *native* dtype; the kernel upcasts per-vreg so mixed-dtype
    # inputs don't pay an extra un-fused HBM pass in the wrapper.
    x_in = x

    # Lane-densification: if D is not a multiple of 128, relabel
    # (L, D) -> (L/k, k*D) so every output store is a full-width 128-lane vst.
    # Pad L up to a multiple of k if needed (one sliver of extra traffic beats
    # masked vst.msk on every row).
    k = 128 // math.gcd(D, 128)
    densified = k > 1
    L_pad = L
    if densified:
        L_pad = ((L + k - 1) // k) * k
        if L_pad != L:
            x_in = jnp.pad(x_in, ((0, 0), (0, L_pad - L), (0, 0)))
        x_in = x_in.reshape(B, L_pad // k, k * D)        # free row-major relabel
        scale_b = jnp.tile(scale_b, (1, 1, k))
        shift_b = jnp.tile(shift_b, (1, 1, k))
        if seq_tile is not None:
            seq_tile = max(1, seq_tile // k)

    out = _featurewise_affine_pallas(
        x_in, scale_b, shift_b, out_dtype, seq_tile=seq_tile, donate_x=donate_x)

    if densified:
        out = out.reshape(B, L_pad, D)
        if L_pad != L:
            out = out[:, :L, :]
    return out


if __name__ == "__main__":
    key = jax.random.PRNGKey(0)

    # Case 1: small canonical shape (batch=2, seq=8, hidden=32).
    B, L, D = 2, 8, 32
    k1, k2, k3, key = jax.random.split(key, 4)
    x = jax.random.normal(k1, (B, L, D), dtype=jnp.float32)
    scale = jax.random.normal(k2, (B, 1, D), dtype=jnp.float32)
    shift = jax.random.normal(k3, (B, 1, D), dtype=jnp.float32)
    ref = x * scale + shift

    # Wrapper default (tiny shape -> fused-XLA fallback path).
    out = jax.block_until_ready(featurewise_affine(x, scale, shift))
    assert out.shape == ref.shape and out.dtype == ref.dtype
    assert jnp.allclose(out, ref, atol=1e-6, rtol=1e-6)

    # Force the Pallas path (lane-densify: D=32 -> k=4 -> kernel sees (2,2,128)).
    out_pl = jax.block_until_ready(
        featurewise_affine(x, scale, shift, min_pallas_bytes=0))
    assert out_pl.shape == ref.shape and out_pl.dtype == ref.dtype
    assert jnp.allclose(out_pl, ref, atol=1e-6, rtol=1e-6)

    # Case 2: L not divisible by k -> pad / densify / slice path (L=10, k=4).
    k4, key = jax.random.split(key)
    x_r = jax.random.normal(k4, (B, 10, D), dtype=jnp.float32)
    ref_r = x_r * scale + shift
    out_r = jax.block_until_ready(
        featurewise_affine(x_r, scale, shift, min_pallas_bytes=0))
    assert out_r.shape == ref_r.shape and out_r.dtype == ref_r.dtype
    assert jnp.allclose(out_r, ref_r, atol=1e-6, rtol=1e-6)

    # Case 3: mixed dtype (bf16 x, f32 scale/shift) -> no wrapper cast of x;
    # the kernel upcasts per-vreg and writes the promoted (f32) output.
    x_bf = x.astype(jnp.bfloat16)
    ref_bf = x_bf.astype(jnp.float32) * scale + shift
    out_bf = jax.block_until_ready(
        featurewise_affine(x_bf, scale, shift, min_pallas_bytes=0))
    assert out_bf.shape == ref_bf.shape and out_bf.dtype == jnp.float32
    assert jnp.allclose(out_bf, ref_bf, atol=1e-6, rtol=1e-6)

    # Case 4: modest lane-dense shape exercising the L-tiled grid, the
    # l-major grid ordering, and the user-seq_tile re-alignment (100 -> 96).
    B2, L2, D2 = 2, 512, 256
    k5, k6, k7, key = jax.random.split(key, 4)
    x2 = jax.random.normal(k5, (B2, L2, D2), dtype=jnp.float32)
    s2 = jax.random.normal(k6, (B2, 1, D2), dtype=jnp.float32)
    h2 = jax.random.normal(k7, (B2, 1, D2), dtype=jnp.float32)
    ref2 = x2 * s2 + h2
    out2 = jax.block_until_ready(
        featurewise_affine(x2, s2, h2, seq_tile=100, min_pallas_bytes=0))
    assert out2.shape == ref2.shape and out2.dtype == ref2.dtype
    assert jnp.allclose(out2, ref2, atol=1e-6, rtol=1e-6)

    print("KERNEL_OK")
</pallas_src>

<mosaic_0001>
module attributes {stable_mosaic.version = 11 : i64} {
  func.func @_featurewise_affine_kernel(%arg0: i32, %arg1: i32, %arg2: memref<1x2x128xf32, #tpu.memory_space<vmem>>, %arg3: memref<1x1x128xf32, #tpu.memory_space<vmem>>, %arg4: memref<1x1x128xf32, #tpu.memory_space<vmem>>, %arg5: memref<1x2x128xf32, #tpu.memory_space<vmem>>) attributes {dimension_semantics = [#tpu.dimension_semantics<parallel>, #tpu.dimension_semantics<parallel>], iteration_bounds = array<i64: 2, 1>, scalar_prefetch = 0 : i64, scratch_operands = 0 : i64, tpu.core_type = #tpu.core_type<tc>, window_params = [{transform_indices = @transform_0, window_bounds = array<i64: 1, 2, 128>}, {transform_indices = @transform_1, window_bounds = array<i64: 1, 1, 128>}, {transform_indices = @transform_2, window_bounds = array<i64: 1, 1, 128>}, {transform_indices = @transform_3, window_bounds = array<i64: 1, 2, 128>}]} {
    %c0 = arith.constant 0 : index
    %c0_0 = arith.constant 0 : index
    %c0_1 = arith.constant 0 : index
    %0 = vector.load %arg2[%c0, %c0_0, %c0_1] : memref<1x2x128xf32, #tpu.memory_space<vmem>>, vector<1x2x128xf32>
    %1 = vector.shape_cast %0 : vector<1x2x128xf32> to vector<2x128xf32>
    %c0_2 = arith.constant 0 : index
    %c0_3 = arith.constant 0 : index
    %c0_4 = arith.constant 0 : index
    %2 = vector.load %arg3[%c0_2, %c0_3, %c0_4] : memref<1x1x128xf32, #tpu.memory_space<vmem>>, vector<1x1x128xf32>
    %3 = vector.shape_cast %2 : vector<1x1x128xf32> to vector<1x128xf32>
    %4 = vector.broadcast %3 : vector<1x128xf32> to vector<2x128xf32>
    %5 = arith.mulf %1, %4 : vector<2x128xf32>
    %c0_5 = arith.constant 0 : index
    %c0_6 = arith.constant 0 : index
    %c0_7 = arith.constant 0 : index
    %6 = vector.load %arg4[%c0_5, %c0_6, %c0_7] : memref<1x1x128xf32, #tpu.memory_space<vmem>>, vector<1x1x128xf32>
    %7 = vector.shape_cast %6 : vector<1x1x128xf32> to vector<1x128xf32>
    %8 = vector.broadcast %7 : vector<1x128xf32> to vector<2x128xf32>
    %9 = arith.addf %5, %8 : vector<2x128xf32>
    %c0_8 = arith.constant 0 : index
    %c0_9 = arith.constant 0 : index
    %c0_10 = arith.constant 0 : index
    %10 = vector.load %arg5[%c0_8, %c0_9, %c0_10] : memref<1x2x128xf32, #tpu.memory_space<vmem>>, vector<1x2x128xf32>
    %11 = vector.shape_cast %10 : vector<1x2x128xf32> to vector<2x128xf32>
    %12 = vector.shape_cast %9 : vector<2x128xf32> to vector<1x2x128xf32>
    tpu.vector_store %arg5[%c0_8, %c0_9, %c0_10], %12 {strides = array<i32>} : memref<1x2x128xf32, #tpu.memory_space<vmem>>, vector<1x2x128xf32>,
    return
  }
  func.func @transform_0(%arg0: i32, %arg1: i32) -> (i32, i32, i32) {
    %c0_i32 = arith.constant 0 : i32
    %c0_i32_0 = arith.constant 0 : i32
    return %arg0, %arg1, %c0_i32 : i32, i32, i32
  }
  func.func @transform_1(%arg0: i32, %arg1: i32) -> (i32, i32, i32) {
    %c0_i32 = arith.constant 0 : i32
    %c0_i32_0 = arith.constant 0 : i32
    %c0_i32_1 = arith.constant 0 : i32
    return %arg0, %c0_i32, %c0_i32_0 : i32, i32, i32
  }
  func.func @transform_2(%arg0: i32, %arg1: i32) -> (i32, i32, i32) {
    %c0_i32 = arith.constant 0 : i32
    %c0_i32_0 = arith.constant 0 : i32
    %c0_i32_1 = arith.constant 0 : i32
    return %arg0, %c0_i32, %c0_i32_0 : i32, i32, i32
  }
  func.func @transform_3(%arg0: i32, %arg1: i32) -> (i32, i32, i32) {
    %c0_i32 = arith.constant 0 : i32
    %c0_i32_0 = arith.constant 0 : i32
    return %arg0, %arg1, %c0_i32 : i32, i32, i32
  }
}

</mosaic_0001>

<llo_original>
// kernel: tpu_custom_call.1
$region0: #{tpu_custom_call.1}
  #allocation0 [shape = 'u32[]', space=smem, size = 0x4, offset = 0x4, fixed_abs, tag = 'smem constant byte address 0x4 - core index']
  #allocation1 [shape = 'u32[144,128]{1,0:T(1,128)}', space=vmem, size = 0x12000, scoped, tag = 'internal scratch']
  %s0 = inlined_call_operand.hbm [shape: f32[2,2,128], index: 0, kind: input, shape index: {}]
  %s1 = inlined_call_operand.hbm [shape: f32[2,1,128], index: 1, kind: input, shape index: {}]
  %s2 = inlined_call_operand.hbm [shape: f32[2,1,128], index: 2, kind: input, shape index: {}]
  %s3 = inlined_call_operand.hbm [shape: f32[2,2,128], index: 3, kind: output, shape index: {}]
  %s4 = sld [smem:[#allocation0]]
  $region57: #{tpu_custom_call.1} parent=0
    _
  %s6 = ssub.s32 1, %s4
  %s7 = scalar_select 0, %s6, %s4
  $region1: #{tpu_custom_call.1} parent=0
    #allocation2 [shape = 'u8[2048]{0}', space=vmem, size = 0x800, scoped, tag = 'input window, operand 0']
    #allocation3 [shape = 's32[2]{0}', space=sflag, size = 0x8, scoped, tag = 'scoped memory for tpu_custom_call.1']
    #allocation4 [shape = 's32[2]{0}', space=sflag, size = 0x8, scoped, tag = 'scoped memory for tpu_custom_call.1']
    #allocation5 [shape = 'u8[1024]{0}', space=vmem, size = 0x400, scoped, tag = 'input window, operand 1']
    #allocation6 [shape = 's32[2]{0}', space=sflag, size = 0x8, scoped, tag = 'scoped memory for tpu_custom_call.1']
    #allocation7 [shape = 'u8[1024]{0}', space=vmem, size = 0x400, scoped, tag = 'input window, operand 2']
    #allocation8 [shape = 'u8[2048]{0}', space=vmem, size = 0x800, scoped, tag = 'output window, operand 0']
    %8 = vsyncpa [#allocation3], 0
    %s9 = scalar_lea.sflag [#allocation3], 1
    %10 = vsyncpa %s9, 0
    %11 = vsyncpa [#allocation6], 0
    %s12 = scalar_lea.sflag [#allocation6], 1
    %13 = vsyncpa %s12, 0
    %14 = vsyncpa [#allocation4], 0
    %s15 = scalar_lea.sflag [#allocation4], 1
    %16 = vsyncpa %s15, 0
    loop: start=0, step=1, limit=4
    $region2: #{tpu_custom_call.1} parent=1 // loop_pre_header
      _
    $region3: #{tpu_custom_call.1} parent=1 // loop_header
      %s18 = sphi 0, %s22
      %p19 = scmp.ge.s32.totalorder %s18, 4
      %s25 = sphi 0, %s37
      %s26 = sphi 0, %s33
      %s27 = sphi 0, %s25
      %s28 = sphi 0, %s26
      %s29 = sphi 0, %s27
      %s30 = sphi 0, %s28
      %s42 = sphi 0, %s44
      %s45 = sphi 0, %s42
      %s46 = sphi 0, %s45
      %s62 = sphi 0, %s46
      %s68 = sphi 0, %s70
      %s71 = sphi 0, %s68
      %s72 = sphi 0, %s71
      %s88 = sphi 0, %s72
      %s94 = sphi 0, %s96
      %s97 = sphi 0, %s94
      %s98 = sphi 0, %s97
      %s114 = sphi 0, %s98
      %s122 = sphi 0, %s124
      %s125 = sphi 0, %s122
      %s126 = sphi 0, %s125
      %s142 = sphi 0, %s126
    $region4: #{tpu_custom_call.1} parent=1 // loop_header_branch
      %21 = sbr.rel (%p19) target = $region8
    $region5: #{tpu_custom_call.1} parent=1 // loop_body
      %s23 = ssub.s32 %s18, 1
      %s24 = ssub.s32 %s18, 2
      %s31 = sadd.s32 1, %s26
      %p32 = scmp.ge.s32.totalorder %s31, 1
      %s33 = scalar_select %p32, 0, %s31
      %s34 = sadd.s32 1, %s25
      %s35 = scalar_select %p32, %s34, %s25
      %p36 = scmp.ge.s32.totalorder %s35, 2
      %s37 = scalar_select %p36, 0, %s35
      %s38 = ssub.s32 %s25, %s37
      %s39 = ssub.s32 %s26, %s33
      %s40 = sor.u32 %s38, %s39
      %p41 = scmp.eq.s32.totalorder %s40, 0
      %s43 = sadd.s32 %s42, 1
      %s44 = scalar_select %p41, %s42, %s43
      %p47 = pneg %p41
      %p48 = scmp.eq.s32.totalorder %s18, 1
      %p49 = por %p47, %p48
      %p50 = scmp.ne.s32.totalorder %s42, %s45
      %p51 = scmp.eq.s32.totalorder %s18, 0
      %p52 = por %p50, %p51
      %p53 = scmp.ne.s32.totalorder %s42, %s45
      %p54 = scmp.eq.s32.totalorder %s23, 1
      %p55 = por %p53, %p54
      %p56 = scmp.ne.s32.totalorder %s45, %s46
      %p57 = scmp.eq.s32.totalorder %s23, 0
      %p58 = por %p56, %p57
      %p59 = scmp.ne.s32.totalorder %s45, %s46
      %p60 = scmp.eq.s32.totalorder %s24, 1
      %p61 = por %p59, %p60
      %p63 = scmp.ne.s32.totalorder %s46, %s62
      %p64 = scmp.eq.s32.totalorder %s24, 0
      %p65 = por %p63, %p64
      %s66 = ssub.s32 %s25, %s37
      %p67 = scmp.eq.s32.totalorder %s66, 0
      %s69 = sadd.s32 %s68, 1
      %s70 = scalar_select %p67, %s68, %s69
      %p73 = pneg %p67
      %p74 = scmp.eq.s32.totalorder %s18, 1
      %p75 = por %p73, %p74
      %p76 = scmp.ne.s32.totalorder %s68, %s71
      %p77 = scmp.eq.s32.totalorder %s18, 0
      %p78 = por %p76, %p77
      %p79 = scmp.ne.s32.totalorder %s68, %s71
      %p80 = scmp.eq.s32.totalorder %s23, 1
      %p81 = por %p79, %p80
      %p82 = scmp.ne.s32.totalorder %s71, %s72
      %p83 = scmp.eq.s32.totalorder %s23, 0
      %p84 = por %p82, %p83
      %p85 = scmp.ne.s32.totalorder %s71, %s72
      %p86 = scmp.eq.s32.totalorder %s24, 1
      %p87 = por %p85, %p86
      %p89 = scmp.ne.s32.totalorder %s72, %s88
      %p90 = scmp.eq.s32.totalorder %s24, 0
      %p91 = por %p89, %p90
      %s92 = ssub.s32 %s25, %s37
      %p93 = scmp.eq.s32.totalorder %s92, 0
      %s95 = sadd.s32 %s94, 1
      %s96 = scalar_select %p93, %s94, %s95
      %p99 = pneg %p93
      %p100 = scmp.eq.s32.totalorder %s18, 1
      %p101 = por %p99, %p100
      %p102 = scmp.ne.s32.totalorder %s94, %s97
      %p103 = scmp.eq.s32.totalorder %s18, 0
      %p104 = por %p102, %p103
      %p105 = scmp.ne.s32.totalorder %s94, %s97
      %p106 = scmp.eq.s32.totalorder %s23, 1
      %p107 = por %p105, %p106
      %p108 = scmp.ne.s32.totalorder %s97, %s98
      %p109 = scmp.eq.s32.totalorder %s23, 0
      %p110 = por %p108, %p109
      %p111 = scmp.ne.s32.totalorder %s97, %s98
      %p112 = scmp.eq.s32.totalorder %s24, 1
      %p113 = por %p111, %p112
      %p115 = scmp.ne.s32.totalorder %s98, %s114
      %p116 = scmp.eq.s32.totalorder %s24, 0
      %p117 = por %p115, %p116
      %s118 = ssub.s32 %s25, %s37
      %s119 = ssub.s32 %s26, %s33
      %s120 = sor.u32 %s118, %s119
      %p121 = scmp.eq.s32.totalorder %s120, 0
      %s123 = sadd.s32 %s122, 1
      %s124 = scalar_select %p121, %s122, %s123
      %p127 = pneg %p121
      %p128 = scmp.eq.s32.totalorder %s18, 1
      %p129 = por %p127, %p128
      %p130 = scmp.ne.s32.totalorder %s122, %s125
      %p131 = scmp.eq.s32.totalorder %s18, 0
      %p132 = por %p130, %p131
      %p133 = scmp.ne.s32.totalorder %s122, %s125
      %p134 = scmp.eq.s32.totalorder %s23, 1
      %p135 = por %p133, %p134
      %p136 = scmp.ne.s32.totalorder %s125, %s126
      %p137 = scmp.eq.s32.totalorder %s23, 0
      %p138 = por %p136, %p137
      %p139 = scmp.ne.s32.totalorder %s125, %s126
      %p140 = scmp.eq.s32.totalorder %s24, 1
      %p141 = por %p139, %p140
      %p143 = scmp.ne.s32.totalorder %s126, %s142
      %p144 = scmp.eq.s32.totalorder %s24, 0
      %p145 = por %p143, %p144
      %p146 = scmp.le.s32.totalorder 1, %s18
      %p147 = scmp.lt.s32.totalorder %s18, 3
      %p148 = pnand %p146, %p147
      %p149 = pneg %p148
      // Predicated region
      $region9: #{tpu_custom_call.1} parent=5 // pred_check
        _
      $region10: #{tpu_custom_call.1} parent=5 // pred_check_branch
        %151 = sbr.rel (%p148) target = $region12
      $region11: #{tpu_custom_call.1} parent=5 // pred_region
        %s152 = ssub.s32 %s18, 1
      $region12: #{tpu_custom_call.1} parent=5 // pred_fallthru
        _
      %p153 = scmp.lt.s32.totalorder %s18, 2
      // Predicated region
      $region13: #{tpu_custom_call.1} parent=5 // pred_check
        %p154 = pneg %p153
      $region14: #{tpu_custom_call.1} parent=5 // pred_check_branch
        %156 = sbr.rel (%p154) target = $region16
      $region15: #{tpu_custom_call.1} parent=5 // pred_region
        // Predicated region
        $region17: #{tpu_custom_call.1} parent=15 // pred_check
          %p157 = pneg %p52
        $region18: #{tpu_custom_call.1} parent=15 // pred_check_branch
          %159 = sbr.rel (%p157) target = $region20
        $region19: #{tpu_custom_call.1} parent=15 // pred_region
          %s160 = sand.u32 %s42, 1
          %s161 = scalar_lea.sflag [#allocation3], %s160
          %s162 = sand.u32 %s42, 1
          %s163 = smul.addr %s162, 2
          %s164 = scalar_lea.vmem [#allocation2], %s163
          %s166 = ssub.s32 32, 32
          %167 = vsyncadd %s161, %s166
          %s168 = sadd.s32 %s26, %s25
          %s169 = smul.addr %s168, 32
          %s170 = scalar_lea.hbm %s0, %s169
          %s172 = sshll.u32 %s164, 4
          %s173 = int_to_ptr.vmem [resolvable:$true] %s172
          %175 = dma.hbm_to_vmem [thread:$0]  %s170, 32, %s173, %s161
        $region20: #{tpu_custom_call.1} parent=15 // pred_fallthru
          _
        // Predicated region
        $region21: #{tpu_custom_call.1} parent=15 // pred_check
          %p176 = pneg %p78
        $region22: #{tpu_custom_call.1} parent=15 // pred_check_branch
          %178 = sbr.rel (%p176) target = $region24
        $region23: #{tpu_custom_call.1} parent=15 // pred_region
          %s179 = sand.u32 %s18, 1
          %s180 = scalar_lea.sflag [#allocation6], %s179
          %s181 = sand.u32 %s68, 1
          %s182 = scalar_lea.vmem [#allocation5], %s181
          %s184 = ssub.s32 16, 16
          %185 = vsyncadd %s180, %s184
          %s186 = smul.addr %s25, 16
          %s187 = scalar_lea.hbm %s1, %s186
          %s189 = sshll.u32 %s182, 4
          %s190 = int_to_ptr.vmem [resolvable:$true] %s189
          %192 = dma.hbm_to_vmem [thread:$0]  %s187, 16, %s190, %s180
        $region24: #{tpu_custom_call.1} parent=15 // pred_fallthru
          _
        // Predicated region
        $region25: #{tpu_custom_call.1} parent=15 // pred_check
          %p193 = pneg %p104
        $region26: #{tpu_custom_call.1} parent=15 // pred_check_branch
          %195 = sbr.rel (%p193) target = $region28
        $region27: #{tpu_custom_call.1} parent=15 // pred_region
          %s196 = sand.u32 %s18, 1
          %s197 = scalar_lea.sflag [#allocation6], %s196
          %s198 = sand.u32 %s94, 1
          %s199 = scalar_lea.vmem [#allocation7], %s198
          %s201 = ssub.s32 16, 16
          %202 = vsyncadd %s197, %s201
          %s203 = smul.addr %s25, 16
          %s204 = scalar_lea.hbm %s2, %s203
          %s206 = sshll.u32 %s199, 4
          %s207 = int_to_ptr.vmem [resolvable:$true] %s206
          %209 = dma.hbm_to_vmem [thread:$0]  %s204, 16, %s207, %s197
        $region28: #{tpu_custom_call.1} parent=15 // pred_fallthru
          _
      $region16: #{tpu_custom_call.1} parent=5 // pred_fallthru
        _
      %p210 = scmp.le.s32.totalorder 1, %s18
      %p211 = scmp.lt.s32.totalorder %s18, 3
      %p212 = pnand %p210, %p211
      %p213 = pneg %p212
      // Predicated region
      $region29: #{tpu_custom_call.1} parent=5 // pred_check
        _
      $region30: #{tpu_custom_call.1} parent=5 // pred_check_branch
        %215 = sbr.rel (%p212) target = $region32
      $region31: #{tpu_custom_call.1} parent=5 // pred_region
        %s216 = ssub.s32 %s18, 1
        %s217 = sand.u32 %s45, 1
        %s218 = scalar_lea.sflag [#allocation3], %s217
        %s219 = sand.u32 %s45, 1
        %s220 = smul.addr %s219, 2
        %s221 = scalar_lea.vmem [#allocation2], %s220
        // Predicated region
        $region33: #{tpu_custom_call.1} parent=31 // pred_check
          %p222 = pneg %p58
        $region34: #{tpu_custom_call.1} parent=31 // pred_check_branch
          %224 = sbr.rel (%p222) target = $region36
        $region35: #{tpu_custom_call.1} parent=31 // pred_region
          %225 = dma.done %s218, 32
        $region36: #{tpu_custom_call.1} parent=31 // pred_fallthru
          _
        %s226 = sand.u32 %s23, 1
        %s227 = scalar_lea.sflag [#allocation6], %s226
        %s228 = sand.u32 %s71, 1
        %s229 = scalar_lea.vmem [#allocation5], %s228
        // Predicated region
        $region37: #{tpu_custom_call.1} parent=31 // pred_check
          %p230 = pneg %p84
        $region38: #{tpu_custom_call.1} parent=31 // pred_check_branch
          %232 = sbr.rel (%p230) target = $region40
        $region39: #{tpu_custom_call.1} parent=31 // pred_region
          %233 = dma.done %s227, 16
        $region40: #{tpu_custom_call.1} parent=31 // pred_fallthru
          _
        %s234 = sand.u32 %s23, 1
        %s235 = scalar_lea.sflag [#allocation6], %s234
        %s236 = sand.u32 %s97, 1
        %s237 = scalar_lea.vmem [#allocation7], %s236
        // Predicated region
        $region41: #{tpu_custom_call.1} parent=31 // pred_check
          %p238 = pneg %p110
        $region42: #{tpu_custom_call.1} parent=31 // pred_check_branch
          %240 = sbr.rel (%p238) target = $region44
        $region43: #{tpu_custom_call.1} parent=31 // pred_region
          %241 = dma.done %s235, 16
        $region44: #{tpu_custom_call.1} parent=31 // pred_fallthru
          _
        %s242 = sand.u32 %s45, 1
        %s243 = scalar_lea.sflag [#allocation3], %s242
        %s244 = sand.u32 %s45, 1
        %s245 = smul.addr %s244, 2
        %s246 = scalar_lea.vmem [#allocation2], %s245
        %p247 = pneg %p58
        %p248 = pneg %p55
        %s249 = sand.u32 %s23, 1
        %s250 = scalar_lea.sflag [#allocation6], %s249
        %s251 = sand.u32 %s71, 1
        %s252 = scalar_lea.vmem [#allocation5], %s251
        %p253 = pneg %p84
        %p254 = pneg %p81
        %s255 = sand.u32 %s23, 1
        %s256 = scalar_lea.sflag [#allocation6], %s255
        %s257 = sand.u32 %s97, 1
        %s258 = scalar_lea.vmem [#allocation7], %s257
        %p259 = pneg %p110
        %p260 = pneg %p107
        %p261 = pneg %p138
        %p262 = pneg %p135
        %s263 = sand.u32 %s125, 1
        %s264 = scalar_lea.sflag [#allocation4], %s263
        %s265 = sand.u32 %s125, 1
        %s266 = smul.addr %s265, 2
        %s267 = scalar_lea.vmem [#allocation8], %s266
        %v268 = vld [vmem:[%s221] sm:$0x3]
        %v269 = vld [vmem:[%s229] sm:$0x1]
        %v271 = vlaneseq
        %v272 = vshrl.u32 %v271, 7
        %v273 = vsub.s32 0, %v272
        %v274 = vrot.slane %v269, %v273
        %v276 = vmul.f32 %v268, %v274
        %v277 = vld [vmem:[%s237] sm:$0x1]
        %v279 = vlaneseq
        %v280 = vshrl.u32 %v279, 7
        %v281 = vsub.s32 0, %v280
        %v282 = vrot.slane %v277, %v281
        %v284 = vadd.f32 %v276, %v282
        %285 = vst [vmem:[%s267] sm:$0x3] %v284
        %s286 = sand.u32 %s125, 1
        %s287 = scalar_lea.sflag [#allocation4], %s286
        %s288 = sand.u32 %s125, 1
        %s289 = smul.addr %s288, 2
        %s290 = scalar_lea.vmem [#allocation8], %s289
        // Predicated region
        $region45: #{tpu_custom_call.1} parent=31 // pred_check
          %p291 = pneg %p135
        $region46: #{tpu_custom_call.1} parent=31 // pred_check_branch
          %293 = sbr.rel (%p291) target = $region48
        $region47: #{tpu_custom_call.1} parent=31 // pred_region
          %s295 = ssub.s32 32, 32
          %296 = vsyncadd %s287, %s295
          %s297 = sadd.s32 %s28, %s27
          %s298 = smul.addr %s297, 32
          %s299 = scalar_lea.hbm %s3, %s298
          %s301 = sshll.u32 %s290, 4
          %s302 = int_to_ptr.vmem [resolvable:$true] %s301
          %304 = dma.vmem_to_hbm [thread:$0]  %s302, 32, %s299, %s287
        $region48: #{tpu_custom_call.1} parent=31 // pred_fallthru
          _
      $region32: #{tpu_custom_call.1} parent=5 // pred_fallthru
        _
      %p305 = scmp.le.s32.totalorder 2, %s18
      // Predicated region
      $region49: #{tpu_custom_call.1} parent=5 // pred_check
        %p306 = pneg %p305
      $region50: #{tpu_custom_call.1} parent=5 // pred_check_branch
        %308 = sbr.rel (%p306) target = $region52
      $region51: #{tpu_custom_call.1} parent=5 // pred_region
        %s309 = ssub.s32 %s18, 2
        // Predicated region
        $region53: #{tpu_custom_call.1} parent=51 // pred_check
          %p310 = pneg %p141
        $region54: #{tpu_custom_call.1} parent=51 // pred_check_branch
          %312 = sbr.rel (%p310) target = $region56
        $region55: #{tpu_custom_call.1} parent=51 // pred_region
          %s313 = sand.u32 %s126, 1
          %s314 = scalar_lea.sflag [#allocation4], %s313
          %s315 = sand.u32 %s126, 1
          %s316 = smul.addr %s315, 2
          %s317 = scalar_lea.vmem [#allocation8], %s316
          %318 = dma.done %s314, 32
        $region56: #{tpu_custom_call.1} parent=51 // pred_fallthru
          _
      $region52: #{tpu_custom_call.1} parent=5 // pred_fallthru
        _
    $region6: #{tpu_custom_call.1} parent=1 // loop_footer
      %s22 = sadd.s32 1, %s18
    $region7: #{tpu_custom_call.1} parent=1 // loop_footer_branch
      %17 = sbr.rel target = $region3
    $region8: #{tpu_custom_call.1} parent=1 // loop_exit
      _
    %319 = vsyncpa [#allocation3], 1
    %s320 = scalar_lea.sflag [#allocation3], 1
    %321 = vsyncpa %s320, 1
    %322 = vsyncpa [#allocation6], 1
    %s323 = scalar_lea.sflag [#allocation6], 1
    %324 = vsyncpa %s323, 1
    %325 = vsyncpa [#allocation4], 1
    %s326 = scalar_lea.sflag [#allocation4], 1
    %327 = vsyncpa %s326, 1

</llo_original>
